<compile_context>
chip_gen: v6e
topology: v6e:2x2x1
jax: 0.10.0
libtpu: 0.0.40
codegen_flags: <defaults>
</compile_context>

<pallas_src>
import random

import jax
import jax.numpy as jnp
from jax import lax
from jax.experimental import pallas as pl
from jax.experimental.pallas import tpu as pltpu


def _mixstyle_kernel(lens_ref,    # scalar-prefetch: (B,) int32 in SMEM
                     xs_ref,      # (1, T, tD)  input tile
                     scale_ref,   # (1, 1, tD)  mixed style scale for this (b, tile)
                     bias_ref,    # (1, 1, tD)  mixed style bias  for this (b, tile)
                     out_ref):    # (1, T, tD)
    b = pl.program_id(0)
    length = lens_ref[b]

    x = xs_ref[0].astype(jnp.float32)                         # (T, tD)
    T = x.shape[0]

    # ----- compute_statistic: length-masked mean / std over time -----------
    # (T, 1) iota -> broadcasts against (T, tD); avoids a full-tile int32 iota.
    t_idx = lax.broadcasted_iota(jnp.int32, (T, 1), 0)
    mask = t_idx < length                                     # (T, 1) bool
    inv_n = 1.0 / jnp.maximum(length, 1).astype(jnp.float32)

    xm = jnp.where(mask, x, 0.0)
    mean = jnp.sum(xm, axis=0, keepdims=True) * inv_n         # (1, tD)
    diff = jnp.where(mask, x - mean, 0.0)
    var = jnp.sum(diff * diff, axis=0, keepdims=True) * inv_n # (1, tD)
    std = jnp.sqrt(var)                                       # (1, tD)

    # ----- fused normalize + mixed affine:  out = x * a + c ----------------
    scale = scale_ref[0].astype(jnp.float32)                  # (1, tD)
    bias = bias_ref[0].astype(jnp.float32)                    # (1, tD)
    a = scale / (std + 1e-5)                                  # row-wise; cheap
    c = bias - mean * a
    out_ref[0] = (x * a + c).astype(out_ref.dtype)


def _pick_channel_tile(T, D, itemsize, budget_bytes):
    """Largest lane-dense channel tile whose double-buffered footprint fits the budget."""
    if D % 128 != 0:
        return D  # ragged / small D: single full-channel block (must equal array dim)

    def step_bytes(td):
        # xs block + out block, double-buffered, plus one f32 working copy of the tile.
        return 2 * 2 * T * td * itemsize + 4 * T * td

    candidates = [td for td in range(128, D + 1, 128) if D % td == 0]
    for td in sorted(candidates, reverse=True):
        if step_bytes(td) <= budget_bytes:
            return td
    return 128


def mixstyle_norm_pallas(xs, x_lens, scale, bias, *, tile_d=None,
                         vmem_budget_bytes=32 * 1024 * 1024):
    """Active (mixing) branch of MixStyleNorm.forward.

    xs:     (B, T, D)   activations
    x_lens: (B,) int32  valid lengths along time
    scale:  (B, D)      mixed style scale  (precomputed in the wrapper)
    bias:   (B, D)      mixed style bias   (precomputed in the wrapper)
    """
    B, T, D = xs.shape
    itemsize = jnp.dtype(xs.dtype).itemsize
    tD = tile_d if tile_d is not None else _pick_channel_tile(T, D, itemsize,
                                                              vmem_budget_bytes)
    assert D % tD == 0, "channel tile must divide D"
    nD = D // tD

    scale3 = scale.reshape(B, 1, D).astype(jnp.float32)
    bias3 = bias.reshape(B, 1, D).astype(jnp.float32)

    grid_spec = pltpu.PrefetchScalarGridSpec(
        num_scalar_prefetch=1,
        grid=(B, nD),
        in_specs=[
            pl.BlockSpec((1, T, tD), lambda b, j, lens: (b, 0, j)),   # xs tile
            pl.BlockSpec((1, 1, tD), lambda b, j, lens: (b, 0, j)),   # scale row
            pl.BlockSpec((1, 1, tD), lambda b, j, lens: (b, 0, j)),   # bias row
        ],
        out_specs=pl.BlockSpec((1, T, tD), lambda b, j, lens: (b, 0, j)),
    )

    return pl.pallas_call(
        _mixstyle_kernel,
        out_shape=jax.ShapeDtypeStruct((B, T, D), xs.dtype),
        grid_spec=grid_spec,
        compiler_params=pltpu.CompilerParams(
            dimension_semantics=("parallel", "parallel"),
            vmem_limit_bytes=48 * 1024 * 1024),
    )(x_lens.astype(jnp.int32), xs, scale3, bias3)


class MixStyleNormPallas:
    """JAX/Pallas port of MixStyleNorm."""

    def __init__(self, d_model: int, style_dim: int, key):
        self.d_model = d_model
        self.style_dim = style_dim
        # nn.Linear(style_dim, 2*d_model, bias=False) -> weight of shape (2*d_model, style_dim)
        bound = 1.0 / jnp.sqrt(jnp.float32(style_dim))
        self.weight = jax.random.uniform(
            key, (2 * d_model, style_dim), jnp.float32, minval=-bound, maxval=bound)

    def mix_scale_bias(self, styles, styles_perm, mix_w):
        """Hoisted style affine: one (B,S)@(S,2D) matmul instead of 4 M=1 matmuls in-kernel."""
        s_mix = mix_w * styles + (1.0 - mix_w) * styles_perm           # (B, S)
        coeff = s_mix @ self.weight.T                                  # (B, 2D)
        return coeff[:, :self.d_model], coeff[:, self.d_model:]        # scale, bias

    def __call__(self, xs, x_lens, styles, key, training: bool = True):
        # Host-side RNG gate, same semantics as `random.random() > 0.2` in PyTorch
        # (no device sync, keeps the skip path free).
        if not training or random.random() > 0.2:
            return xs

        B = xs.shape[0]
        k_perm, k_beta = jax.random.split(key)
        idxs = jax.random.permutation(k_perm, B)                       # torch.randperm(bs)
        styles_perm = styles[idxs]
        mix_w = jax.random.beta(k_beta, 0.1, 0.1, (B, 1)).astype(jnp.float32)

        scale, bias = self.mix_scale_bias(styles, styles_perm, mix_w)
        return mixstyle_norm_pallas(xs, x_lens, scale, bias)


def _reference_active_branch(xs, x_lens, styles, styles_perm, weight, mix_w, d_model):
    """Pure-JAX reference of the active (mixing) branch (mirrors the PyTorch forward)."""
    coeff1 = styles @ weight.T
    coeff2 = styles_perm @ weight.T
    mu1, sig1 = coeff1[:, :d_model], coeff1[:, d_model:]
    mu2, sig2 = coeff2[:, :d_model], coeff2[:, d_model:]
    scale = mix_w * mu1 + (1 - mix_w) * mu2
    bias = mix_w * sig1 + (1 - mix_w) * sig2

    B, T, D = xs.shape
    mask = (jnp.arange(T)[None, :] < x_lens[:, None]).astype(jnp.float32)[..., None]
    n = jnp.maximum(x_lens, 1).astype(jnp.float32)[:, None]
    mean = jnp.sum(xs * mask, axis=1) / n
    var = jnp.sum(((xs - mean[:, None, :]) ** 2) * mask, axis=1) / n
    std = jnp.sqrt(var)
    xn = (xs - mean[:, None, :]) / (std[:, None, :] + 1e-5)
    return scale[:, None, :] * xn + bias[:, None, :]


if __name__ == "__main__":
    random.seed(0)
    key = jax.random.PRNGKey(0)
    k_w, k_x, k_s, k_fwd = jax.random.split(key, 4)

    # ---- case 1: small shapes (D < 128 -> single full-channel block) ----
    B, T, D, S = 2, 16, 32, 8
    xs = jax.random.normal(k_x, (B, T, D), jnp.float32)
    styles = jax.random.normal(k_s, (B, S), jnp.float32)
    x_lens = jnp.array([16, 11], dtype=jnp.int32)

    module = MixStyleNormPallas(d_model=D, style_dim=S, key=k_w)

    k_perm, k_beta = jax.random.split(k_fwd)
    idxs = jax.random.permutation(k_perm, B)
    styles_perm = styles[idxs]
    mix_w = jax.random.beta(k_beta, 0.1, 0.1, (B, 1)).astype(jnp.float32)

    scale, bias = module.mix_scale_bias(styles, styles_perm, mix_w)
    out = mixstyle_norm_pallas(xs, x_lens, scale, bias)
    out = jax.block_until_ready(out)

    ref = _reference_active_branch(xs, x_lens, styles, styles_perm,
                                   module.weight, mix_w, D)
    assert out.shape == xs.shape and out.dtype == xs.dtype
    assert jnp.allclose(out, ref, atol=1e-4, rtol=1e-4), "case1 mismatch vs reference"

    # ---- case 2: channel-tiled path (D = 256 split into two 128-lane tiles) ----
    B2, T2, D2, S2 = 2, 32, 256, 8
    k_x2, k_s2, k_w2, k_p2, k_b2 = jax.random.split(jax.random.PRNGKey(1), 5)
    xs2 = jax.random.normal(k_x2, (B2, T2, D2), jnp.float32)
    styles2 = jax.random.normal(k_s2, (B2, S2), jnp.float32)
    x_lens2 = jnp.array([32, 20], dtype=jnp.int32)

    module2 = MixStyleNormPallas(d_model=D2, style_dim=S2, key=k_w2)
    idxs2 = jax.random.permutation(k_p2, B2)
    styles_perm2 = styles2[idxs2]
    mix_w2 = jax.random.beta(k_b2, 0.1, 0.1, (B2, 1)).astype(jnp.float32)

    scale2, bias2 = module2.mix_scale_bias(styles2, styles_perm2, mix_w2)
    out2 = mixstyle_norm_pallas(xs2, x_lens2, scale2, bias2, tile_d=128)
    out2 = jax.block_until_ready(out2)

    ref2 = _reference_active_branch(xs2, x_lens2, styles2, styles_perm2,
                                    module2.weight, mix_w2, D2)
    assert jnp.allclose(out2, ref2, atol=1e-4, rtol=1e-4), "case2 mismatch vs reference"

    # ---- also exercise the full module call (stochastic gate / skip path) ----
    _ = jax.block_until_ready(module(xs, x_lens, styles, k_fwd, training=True))

    print("KERNEL_OK")
</pallas_src>

<mosaic_0001>
module attributes {stable_mosaic.version = 11 : i64} {
  func.func @_mixstyle_kernel(%arg0: i32, %arg1: i32, %arg2: memref<2xi32, #tpu.memory_space<smem>>, %arg3: memref<1x16x32xf32, #tpu.memory_space<vmem>>, %arg4: memref<1x1x32xf32, #tpu.memory_space<vmem>>, %arg5: memref<1x1x32xf32, #tpu.memory_space<vmem>>, %arg6: memref<1x16x32xf32, #tpu.memory_space<vmem>>) attributes {dimension_semantics = [#tpu.dimension_semantics<parallel>, #tpu.dimension_semantics<parallel>], iteration_bounds = array<i64: 2, 1>, scalar_prefetch = 1 : i64, scratch_operands = 0 : i64, tpu.core_type = #tpu.core_type<tc>, window_params = [{transform_indices = @transform_0, window_bounds = array<i64: 1, 16, 32>}, {transform_indices = @transform_1, window_bounds = array<i64: 1, 1, 32>}, {transform_indices = @transform_2, window_bounds = array<i64: 1, 1, 32>}, {transform_indices = @transform_3, window_bounds = array<i64: 1, 16, 32>}]} {
    %0 = arith.index_cast %arg0 : i32 to index
    %1 = memref.load %arg2[%0] : memref<2xi32, #tpu.memory_space<smem>>
    %c0 = arith.constant 0 : index
    %c0_0 = arith.constant 0 : index
    %c0_1 = arith.constant 0 : index
    %2 = vector.load %arg3[%c0, %c0_0, %c0_1] : memref<1x16x32xf32, #tpu.memory_space<vmem>>, vector<1x16x32xf32>
    %3 = vector.shape_cast %2 : vector<1x16x32xf32> to vector<16x32xf32>
    %4 = tpu.iota {dimensions = array<i32: 0>} : vector<16x1xi32>
    %5 = vector.broadcast %1 : i32 to vector<16x1xi32>
    %6 = arith.cmpi slt, %4, %5 : vector<16x1xi32>
    %c1_i32 = arith.constant 1 : i32
    %7 = arith.maxsi %1, %c1_i32 : i32
    %8 = arith.sitofp %7 : i32 to f32
    %cst = arith.constant 1.000000e+00 : f32
    %9 = arith.divf %cst, %8 : f32
    %cst_2 = arith.constant 0.000000e+00 : f32
    %10 = vector.shape_cast %6 : vector<16x1xi1> to vector<16x1xi1>
    %11 = vector.broadcast %10 : vector<16x1xi1> to vector<16x32xi1>
    %12 = vector.broadcast %cst_2 : f32 to vector<16x32xf32>
    %13 = arith.select %11, %3, %12 : vector<16x32xi1>, vector<16x32xf32>
    %cst_3 = arith.constant dense<0.000000e+00> : vector<32xf32>
    %14 = vector.multi_reduction <add>, %13, %cst_3 [0] : vector<16x32xf32> to vector<32xf32>
    %15 = vector.shape_cast %14 : vector<32xf32> to vector<1x32xf32>
    %16 = vector.broadcast %9 : f32 to vector<1x32xf32>
    %17 = arith.mulf %15, %16 : vector<1x32xf32>
    %18 = vector.broadcast %17 : vector<1x32xf32> to vector<16x32xf32>
    %19 = arith.subf %3, %18 : vector<16x32xf32>
    %cst_4 = arith.constant 0.000000e+00 : f32
    %20 = vector.shape_cast %6 : vector<16x1xi1> to vector<16x1xi1>
    %21 = vector.broadcast %20 : vector<16x1xi1> to vector<16x32xi1>
    %22 = vector.broadcast %cst_4 : f32 to vector<16x32xf32>
    %23 = arith.select %21, %19, %22 : vector<16x32xi1>, vector<16x32xf32>
    %24 = arith.mulf %23, %23 : vector<16x32xf32>
    %cst_5 = arith.constant dense<0.000000e+00> : vector<32xf32>
    %25 = vector.multi_reduction <add>, %24, %cst_5 [0] : vector<16x32xf32> to vector<32xf32>
    %26 = vector.shape_cast %25 : vector<32xf32> to vector<1x32xf32>
    %27 = vector.broadcast %9 : f32 to vector<1x32xf32>
    %28 = arith.mulf %26, %27 : vector<1x32xf32>
    %29 = math.sqrt %28 : vector<1x32xf32>
    %c0_6 = arith.constant 0 : index
    %c0_7 = arith.constant 0 : index
    %c0_8 = arith.constant 0 : index
    %30 = vector.load %arg4[%c0_6, %c0_7, %c0_8] : memref<1x1x32xf32, #tpu.memory_space<vmem>>, vector<1x1x32xf32>
    %31 = vector.shape_cast %30 : vector<1x1x32xf32> to vector<1x32xf32>
    %c0_9 = arith.constant 0 : index
    %c0_10 = arith.constant 0 : index
    %c0_11 = arith.constant 0 : index
    %32 = vector.load %arg5[%c0_9, %c0_10, %c0_11] : memref<1x1x32xf32, #tpu.memory_space<vmem>>, vector<1x1x32xf32>
    %33 = vector.shape_cast %32 : vector<1x1x32xf32> to vector<1x32xf32>
    %cst_12 = arith.constant 9.99999974E-6 : f32
    %34 = vector.broadcast %cst_12 : f32 to vector<1x32xf32>
    %35 = arith.addf %29, %34 : vector<1x32xf32>
    %36 = arith.divf %31, %35 : vector<1x32xf32>
    %37 = arith.mulf %17, %36 : vector<1x32xf32>
    %38 = arith.subf %33, %37 : vector<1x32xf32>
    %39 = vector.broadcast %36 : vector<1x32xf32> to vector<16x32xf32>
    %40 = arith.mulf %3, %39 : vector<16x32xf32>
    %41 = vector.broadcast %38 : vector<1x32xf32> to vector<16x32xf32>
    %42 = arith.addf %40, %41 : vector<16x32xf32>
    %c0_13 = arith.constant 0 : index
    %c0_14 = arith.constant 0 : index
    %c0_15 = arith.constant 0 : index
    %43 = vector.load %arg6[%c0_13, %c0_14, %c0_15] : memref<1x16x32xf32, #tpu.memory_space<vmem>>, vector<1x16x32xf32>
    %44 = vector.shape_cast %43 : vector<1x16x32xf32> to vector<16x32xf32>
    %45 = vector.shape_cast %42 : vector<16x32xf32> to vector<1x16x32xf32>
    tpu.vector_store %arg6[%c0_13, %c0_14, %c0_15], %45 {strides = array<i32>} : memref<1x16x32xf32, #tpu.memory_space<vmem>>, vector<1x16x32xf32>,
    return
  }
  func.func @transform_0(%arg0: i32, %arg1: i32, %arg2: memref<2xi32, #tpu.memory_space<smem>>) -> (i32, i32, i32) {
    %c0_i32 = arith.constant 0 : i32
    %c0_i32_0 = arith.constant 0 : i32
    return %arg0, %c0_i32, %arg1 : i32, i32, i32
  }
  func.func @transform_1(%arg0: i32, %arg1: i32, %arg2: memref<2xi32, #tpu.memory_space<smem>>) -> (i32, i32, i32) {
    %c0_i32 = arith.constant 0 : i32
    %c0_i32_0 = arith.constant 0 : i32
    return %arg0, %c0_i32, %arg1 : i32, i32, i32
  }
  func.func @transform_2(%arg0: i32, %arg1: i32, %arg2: memref<2xi32, #tpu.memory_space<smem>>) -> (i32, i32, i32) {
    %c0_i32 = arith.constant 0 : i32
    %c0_i32_0 = arith.constant 0 : i32
    return %arg0, %c0_i32, %arg1 : i32, i32, i32
  }
  func.func @transform_3(%arg0: i32, %arg1: i32, %arg2: memref<2xi32, #tpu.memory_space<smem>>) -> (i32, i32, i32) {
    %c0_i32 = arith.constant 0 : i32
    %c0_i32_0 = arith.constant 0 : i32
    return %arg0, %c0_i32, %arg1 : i32, i32, i32
  }
}

</mosaic_0001>

<llo_original>
// kernel: tpu_custom_call.1
$region0: #{tpu_custom_call.1}
  #allocation0 [shape = 'u32[]', space=smem, size = 0x4, offset = 0x4, fixed_abs, tag = 'smem constant byte address 0x4 - core index']
  #allocation1 [shape = 'u32[144,128]{1,0:T(1,128)}', space=vmem, size = 0x12000, scoped, tag = 'internal scratch']
  #allocation2 [shape = 's32[1]{0}', space=sflag, size = 0x4, scoped, tag = 'scoped memory for tpu_custom_call.1']
  #allocation3 [shape = 'u8[512]{0}', space=smem, size = 0x200, scoped, tag = 'prefetched SMEM operand 0']
  %s0 = inlined_call_operand.hbm [shape: s32[2], index: 0, kind: input, shape index: {}]
  %s1 = inlined_call_operand.hbm [shape: f32[2,16,32], index: 1, kind: input, shape index: {}]
  %s2 = inlined_call_operand.vmem [shape: f32[2,1,32], index: 2, kind: input, shape index: {}]
  %s3 = inlined_call_operand.vmem [shape: f32[2,1,32], index: 3, kind: input, shape index: {}]
  %s4 = inlined_call_operand.hbm [shape: f32[2,16,32], index: 4, kind: output, shape index: {}]
  %s5 = sld [smem:[#allocation0]]
  $region49: #{tpu_custom_call.1} parent=0
    _
  %s7 = ssub.s32 1, %s5
  %s8 = scalar_select 0, %s7, %s5
  %10 = dma.hbm_to_smem %s0, 16, [#allocation3], [#allocation2]
  %11 = dma.done [#allocation2], 16
  %12 = sfence
  $region1: #{tpu_custom_call.1} parent=0
    #allocation4 [shape = 'u8[16384]{0}', space=vmem, size = 0x4000, scoped, tag = 'input window, operand 1']
    #allocation5 [shape = 's32[2]{0}', space=sflag, size = 0x8, scoped, tag = 'scoped memory for tpu_custom_call.1']
    #allocation6 [shape = 's32[2]{0}', space=sflag, size = 0x8, scoped, tag = 'scoped memory for tpu_custom_call.1']
    #allocation7 [shape = 'u8[16384]{0}', space=vmem, size = 0x4000, scoped, tag = 'output window, operand 0']
    %13 = vsyncpa [#allocation5], 0
    %s14 = scalar_lea.sflag [#allocation5], 1
    %15 = vsyncpa %s14, 0
    %16 = vsyncpa [#allocation6], 0
    %s17 = scalar_lea.sflag [#allocation6], 1
    %18 = vsyncpa %s17, 0
    loop: start=0, step=1, limit=4
    $region2: #{tpu_custom_call.1} parent=1 // loop_pre_header
      _
    $region3: #{tpu_custom_call.1} parent=1 // loop_header
      %s20 = sphi 0, %s24
      %p21 = scmp.ge.s32.totalorder %s20, 4
      %s27 = sphi 0, %s39
      %s28 = sphi 0, %s35
      %s29 = sphi 0, %s27
      %s30 = sphi 0, %s28
      %s31 = sphi 0, %s29
      %s32 = sphi 0, %s30
      %s44 = sphi 0, %s46
      %s47 = sphi 0, %s44
      %s48 = sphi 0, %s47
      %s64 = sphi 0, %s48
      %s72 = sphi 0, %s74
      %s75 = sphi 0, %s72
      %s76 = sphi 0, %s75
      %s92 = sphi 0, %s76
      %s100 = sphi 0, %s102
      %s103 = sphi 0, %s100
      %s104 = sphi 0, %s103
      %s120 = sphi 0, %s104
      %s128 = sphi 0, %s130
      %s131 = sphi 0, %s128
      %s132 = sphi 0, %s131
      %s148 = sphi 0, %s132
    $region4: #{tpu_custom_call.1} parent=1 // loop_header_branch
      %23 = sbr.rel (%p21) target = $region8
    $region5: #{tpu_custom_call.1} parent=1 // loop_body
      %s25 = ssub.s32 %s20, 1
      %s26 = ssub.s32 %s20, 2
      %s33 = sadd.s32 1, %s28
      %p34 = scmp.ge.s32.totalorder %s33, 1
      %s35 = scalar_select %p34, 0, %s33
      %s36 = sadd.s32 1, %s27
      %s37 = scalar_select %p34, %s36, %s27
      %p38 = scmp.ge.s32.totalorder %s37, 2
      %s39 = scalar_select %p38, 0, %s37
      %s40 = ssub.s32 %s27, %s39
      %s41 = ssub.s32 %s28, %s35
      %s42 = sor.u32 %s40, %s41
      %p43 = scmp.eq.s32.totalorder %s42, 0
      %s45 = sadd.s32 %s44, 1
      %s46 = scalar_select %p43, %s44, %s45
      %p49 = pneg %p43
      %p50 = scmp.eq.s32.totalorder %s20, 1
      %p51 = por %p49, %p50
      %p52 = scmp.ne.s32.totalorder %s44, %s47
      %p53 = scmp.eq.s32.totalorder %s20, 0
      %p54 = por %p52, %p53
      %p55 = scmp.ne.s32.totalorder %s44, %s47
      %p56 = scmp.eq.s32.totalorder %s25, 1
      %p57 = por %p55, %p56
      %p58 = scmp.ne.s32.totalorder %s47, %s48
      %p59 = scmp.eq.s32.totalorder %s25, 0
      %p60 = por %p58, %p59
      %p61 = scmp.ne.s32.totalorder %s47, %s48
      %p62 = scmp.eq.s32.totalorder %s26, 1
      %p63 = por %p61, %p62
      %p65 = scmp.ne.s32.totalorder %s48, %s64
      %p66 = scmp.eq.s32.totalorder %s26, 0
      %p67 = por %p65, %p66
      %s68 = ssub.s32 %s27, %s39
      %s69 = ssub.s32 %s28, %s35
      %s70 = sor.u32 %s68, %s69
      %p71 = scmp.eq.s32.totalorder %s70, 0
      %s73 = sadd.s32 %s72, 1
      %s74 = scalar_select %p71, %s72, %s73
      %p77 = pneg %p71
      %p78 = scmp.eq.s32.totalorder %s20, 1
      %p79 = por %p77, %p78
      %p80 = scmp.ne.s32.totalorder %s72, %s75
      %p81 = scmp.eq.s32.totalorder %s20, 0
      %p82 = por %p80, %p81
      %p83 = scmp.ne.s32.totalorder %s72, %s75
      %p84 = scmp.eq.s32.totalorder %s25, 1
      %p85 = por %p83, %p84
      %p86 = scmp.ne.s32.totalorder %s75, %s76
      %p87 = scmp.eq.s32.totalorder %s25, 0
      %p88 = por %p86, %p87
      %p89 = scmp.ne.s32.totalorder %s75, %s76
      %p90 = scmp.eq.s32.totalorder %s26, 1
      %p91 = por %p89, %p90
      %p93 = scmp.ne.s32.totalorder %s76, %s92
      %p94 = scmp.eq.s32.totalorder %s26, 0
      %p95 = por %p93, %p94
      %s96 = ssub.s32 %s27, %s39
      %s97 = ssub.s32 %s28, %s35
      %s98 = sor.u32 %s96, %s97
      %p99 = scmp.eq.s32.totalorder %s98, 0
      %s101 = sadd.s32 %s100, 1
      %s102 = scalar_select %p99, %s100, %s101
      %p105 = pneg %p99
      %p106 = scmp.eq.s32.totalorder %s20, 1
      %p107 = por %p105, %p106
      %p108 = scmp.ne.s32.totalorder %s100, %s103
      %p109 = scmp.eq.s32.totalorder %s20, 0
      %p110 = por %p108, %p109
      %p111 = scmp.ne.s32.totalorder %s100, %s103
      %p112 = scmp.eq.s32.totalorder %s25, 1
      %p113 = por %p111, %p112
      %p114 = scmp.ne.s32.totalorder %s103, %s104
      %p115 = scmp.eq.s32.totalorder %s25, 0
      %p116 = por %p114, %p115
      %p117 = scmp.ne.s32.totalorder %s103, %s104
      %p118 = scmp.eq.s32.totalorder %s26, 1
      %p119 = por %p117, %p118
      %p121 = scmp.ne.s32.totalorder %s104, %s120
      %p122 = scmp.eq.s32.totalorder %s26, 0
      %p123 = por %p121, %p122
      %s124 = ssub.s32 %s27, %s39
      %s125 = ssub.s32 %s28, %s35
      %s126 = sor.u32 %s124, %s125
      %p127 = scmp.eq.s32.totalorder %s126, 0
      %s129 = sadd.s32 %s128, 1
      %s130 = scalar_select %p127, %s128, %s129
      %p133 = pneg %p127
      %p134 = scmp.eq.s32.totalorder %s20, 1
      %p135 = por %p133, %p134
      %p136 = scmp.ne.s32.totalorder %s128, %s131
      %p137 = scmp.eq.s32.totalorder %s20, 0
      %p138 = por %p136, %p137
      %p139 = scmp.ne.s32.totalorder %s128, %s131
      %p140 = scmp.eq.s32.totalorder %s25, 1
      %p141 = por %p139, %p140
      %p142 = scmp.ne.s32.totalorder %s131, %s132
      %p143 = scmp.eq.s32.totalorder %s25, 0
      %p144 = por %p142, %p143
      %p145 = scmp.ne.s32.totalorder %s131, %s132
      %p146 = scmp.eq.s32.totalorder %s26, 1
      %p147 = por %p145, %p146
      %p149 = scmp.ne.s32.totalorder %s132, %s148
      %p150 = scmp.eq.s32.totalorder %s26, 0
      %p151 = por %p149, %p150
      %p152 = scmp.le.s32.totalorder 1, %s20
      %p153 = scmp.lt.s32.totalorder %s20, 3
      %p154 = pnand %p152, %p153
      %p155 = pneg %p154
      // Predicated region
      $region9: #{tpu_custom_call.1} parent=5 // pred_check
        _
      $region10: #{tpu_custom_call.1} parent=5 // pred_check_branch
        %157 = sbr.rel (%p154) target = $region12
      $region11: #{tpu_custom_call.1} parent=5 // pred_region
        %s158 = ssub.s32 %s20, 1
      $region12: #{tpu_custom_call.1} parent=5 // pred_fallthru
        _
      %p159 = scmp.lt.s32.totalorder %s20, 2
      // Predicated region
      $region13: #{tpu_custom_call.1} parent=5 // pred_check
        %p160 = pneg %p159
      $region14: #{tpu_custom_call.1} parent=5 // pred_check_branch
        %162 = sbr.rel (%p160) target = $region16
      $region15: #{tpu_custom_call.1} parent=5 // pred_region
        // Predicated region
        $region17: #{tpu_custom_call.1} parent=15 // pred_check
          %p163 = pneg %p54
        $region18: #{tpu_custom_call.1} parent=15 // pred_check_branch
          %165 = sbr.rel (%p163) target = $region20
        $region19: #{tpu_custom_call.1} parent=15 // pred_region
          %s166 = sand.u32 %s44, 1
          %s167 = scalar_lea.sflag [#allocation5], %s166
          %s168 = sand.u32 %s44, 1
          %s169 = smul.addr %s168, 16
          %s170 = scalar_lea.vmem [#allocation4], %s169
          %s172 = ssub.s32 256, 256
          %173 = vsyncadd %s167, %s172
          %s174 = smul.addr %s27, 2
          %s175 = sadd.s32 %s28, %s174
          %s176 = smul.addr %s175, 128
          %s177 = scalar_lea.hbm %s1, %s176
          %s178 = sshll.u32 %s170, 4
          %s179 = int_to_ptr.vmem [resolvable:$true] %s178
          %184 = dma.hbm_to_vmem [thread:$0]  %s177, 256, %s179, %s167, 128, 128, 8
        $region20: #{tpu_custom_call.1} parent=15 // pred_fallthru
          _
        // Predicated region
        $region21: #{tpu_custom_call.1} parent=15 // pred_check
          %p185 = pneg %p82
        $region22: #{tpu_custom_call.1} parent=15 // pred_check_branch
          %187 = sbr.rel (%p185) target = $region24
        $region23: #{tpu_custom_call.1} parent=15 // pred_region
          %p188 = scmp.lt.s32.totalorder %s27, 1
          %s189 = scalar_select %p188, %s27, 1
          %p190 = scmp.lt.s32.totalorder %s28, 0
          %s191 = scalar_select %p190, %s28, 0
          %s192 = sadd.s32 %s191, %s189
          %s193 = scalar_lea.vmem %s2, %s192
        $region24: #{tpu_custom_call.1} parent=15 // pred_fallthru
          _
        // Predicated region
        $region25: #{tpu_custom_call.1} parent=15 // pred_check
          %p194 = pneg %p110
        $region26: #{tpu_custom_call.1} parent=15 // pred_check_branch
          %196 = sbr.rel (%p194) target = $region28
        $region27: #{tpu_custom_call.1} parent=15 // pred_region
          %p197 = scmp.lt.s32.totalorder %s27, 1
          %s198 = scalar_select %p197, %s27, 1
          %p199 = scmp.lt.s32.totalorder %s28, 0
          %s200 = scalar_select %p199, %s28, 0
          %s201 = sadd.s32 %s200, %s198
          %s202 = scalar_lea.vmem %s3, %s201
        $region28: #{tpu_custom_call.1} parent=15 // pred_fallthru
          _
      $region16: #{tpu_custom_call.1} parent=5 // pred_fallthru
        _
      %p203 = scmp.le.s32.totalorder 1, %s20
      %p204 = scmp.lt.s32.totalorder %s20, 3
      %p205 = pnand %p203, %p204
      %p206 = pneg %p205
      // Predicated region
      $region29: #{tpu_custom_call.1} parent=5 // pred_check
        _
      $region30: #{tpu_custom_call.1} parent=5 // pred_check_branch
        %208 = sbr.rel (%p205) target = $region32
      $region31: #{tpu_custom_call.1} parent=5 // pred_region
        %s209 = ssub.s32 %s20, 1
        %s210 = sand.u32 %s47, 1
        %s211 = scalar_lea.sflag [#allocation5], %s210
        %s212 = sand.u32 %s47, 1
        %s213 = smul.addr %s212, 16
        %s214 = scalar_lea.vmem [#allocation4], %s213
        // Predicated region
        $region33: #{tpu_custom_call.1} parent=31 // pred_check
          %p215 = pneg %p60
        $region34: #{tpu_custom_call.1} parent=31 // pred_check_branch
          %217 = sbr.rel (%p215) target = $region36
        $region35: #{tpu_custom_call.1} parent=31 // pred_region
          %218 = dma.done %s211, 256
        $region36: #{tpu_custom_call.1} parent=31 // pred_fallthru
          _
        %s219 = sand.u32 %s47, 1
        %s220 = scalar_lea.sflag [#allocation5], %s219
        %s221 = sand.u32 %s47, 1
        %s222 = smul.addr %s221, 16
        %s223 = scalar_lea.vmem [#allocation4], %s222
        %p224 = pneg %p60
        %p225 = pneg %p57
        %p226 = scmp.lt.s32.totalorder %s29, 1
        %s227 = scalar_select %p226, %s29, 1
        %p228 = scmp.lt.s32.totalorder %s30, 0
        %s229 = scalar_select %p228, %s30, 0
        %s230 = sadd.s32 %s229, %s227
        %s231 = scalar_lea.vmem %s2, %s230
        %p232 = pneg %p88
        %p233 = pneg %p85
        %p234 = scmp.lt.s32.totalorder %s29, 1
        %s235 = scalar_select %p234, %s29, 1
        %p236 = scmp.lt.s32.totalorder %s30, 0
        %s237 = scalar_select %p236, %s30, 0
        %s238 = sadd.s32 %s237, %s235
        %s239 = scalar_lea.vmem %s3, %s238
        %p240 = pneg %p116
        %p241 = pneg %p113
        %p242 = pneg %p144
        %p243 = pneg %p141
        %s244 = sand.u32 %s131, 1
        %s245 = scalar_lea.sflag [#allocation6], %s244
        %s246 = sand.u32 %s131, 1
        %s247 = smul.addr %s246, 16
        %s248 = scalar_lea.vmem [#allocation7], %s247
        %p249 = scmp.lt.s32.totalorder %s29, 1
        %s250 = scalar_select %p249, %s29, 1
        %p251 = scmp.lt.s32.totalorder %s30, 0
        %s252 = scalar_select %p251, %s30, 0
        %s253 = sadd.s32 %s252, %s250
        %s254 = scalar_lea.vmem %s2, %s253
        %p255 = scmp.lt.s32.totalorder %s29, 1
        %s256 = scalar_select %p255, %s29, 1
        %p257 = scmp.lt.s32.totalorder %s30, 0
        %s258 = scalar_select %p257, %s30, 0
        %s259 = sadd.s32 %s258, %s256
        %s260 = scalar_lea.vmem %s3, %s259
        %s261 = sld [smem:[#allocation3 + %s29]]
        %v262 = vld [vmem:[%s214] sm:$0xff]
        %v263 = vld [vmem:[%s214 + $0x8] sm:$0xff]
        %v264 = vlaneseq
        %v265 = vshrl.u32 %v264, 7
        %v266 = vadd.s32 %v265, 8
        %v267 = vstv %s261
        %vm268 = vcmp.lt.s32.totalorder %v265, %v267
        %vm269 = vcmp.lt.s32.totalorder %v266, %v267
        %p270 = scmp.gt.s32.totalorder %s261, 1
        %s271 = scalar_select %p270, %s261, 1
        %s272 = scvt.s32.f32 %s271
        %v273 = vstv %s272
        %v274 = vrcp.pop %v273
        %s275 = vtos %v274
        %v276 = vsel %vm268, 1, 0
        %v277 = vsel %vm269, 1, 0
        %vm278 = vcmp.eq.s32.totalorder %v276, 1
        %vm279 = vcmp.eq.s32.totalorder %v277, 1
        %v280 = vsel %vm278, %v262, 0.0
        %v281 = vsel %vm279, %v263, 0.0
        %vm282 = vcmask 261120
        %v283 = vsel %vm282, %v280, 0.0
        %v284 = vsel %vm282, %v281, 0.0
        %v285 = vadd.f32 %v283, %v284
        %v286 = vrot.slane %v285, 4
        %v287 = vadd.f32 %v285, %v286
        %v288 = vrot.slane %v287, 2
        %v289 = vadd.f32 %v287, %v288
        %v290 = vrot.slane %v289, 1
        %v291 = vadd.f32 %v289, %v290
        %v292 = vstv %s275
        %v293 = vmul.f32 %v291, %v292
        %v294 = vsub.f32 %v262, %v293
        %v295 = vsub.f32 %v263, %v293
        %v296 = vsel %vm278, %v294, 0.0
        %v297 = vsel %vm279, %v295, 0.0
        %v298 = vmul.f32 %v296, %v296
        %v299 = vmul.f32 %v297, %v297
        %v300 = vsel %vm282, %v298, 0.0
        %v301 = vsel %vm282, %v299, 0.0
        %v302 = vadd.f32 %v300, %v301
        %v303 = vrot.slane %v302, 4
        %v304 = vadd.f32 %v302, %v303
        %v305 = vrot.slane %v304, 2
        %v306 = vadd.f32 %v304, %v305
        %v307 = vrot.slane %v306, 1
        %v308 = vadd.f32 %v306, %v307
        %v309 = vmul.f32 %v308, %v292
        %v310 = vrsqrt.pop %v309
        %v311 = vmul.f32 %v309, %v310
        %vm312 = vcmp.eq.f32.partialorder %v309, inf
        %v313 = vsel %vm312, %v309, %v311
        %vm314 = vcmp.eq.f32.partialorder %v309, 0.0
        %v315 = vand.u32 %v309, 2147483648
        %v316 = vsel %vm314, %v315, %v313
        %v317 = vld [vmem:[%s254] sm:$0x1]
        %v318 = vld [vmem:[%s260] sm:$0x1]
        %v319 = vadd.f32 %v316, 1e-05
        %v320 = vrcp.pop %v319
        %v321 = vmul.f32 %v317, %v320
        %v322 = vmul.f32 %v293, %v321
        %v323 = vsub.f32 %v318, %v322
        %v325 = vlaneseq
        %v326 = vshrl.u32 %v325, 7
        %v327 = vsub.s32 0, %v326
        %v328 = vrot.slane %v321, %v327
        %v330 = vmul.f32 %v262, %v328
        %v331 = vmul.f32 %v263, %v328
        %v333 = vlaneseq
        %v334 = vshrl.u32 %v333, 7
        %v335 = vsub.s32 0, %v334
        %v336 = vrot.slane %v323, %v335
        %v338 = vadd.f32 %v330, %v336
        %v339 = vadd.f32 %v331, %v336
        %340 = vst.msk [vmem:[%s248] sm:$0xff] %vm282, %v338
        %341 = vst.msk [vmem:[%s248 + $0x8] sm:$0xff] %vm282, %v339
        %s342 = sand.u32 %s131, 1
        %s343 = scalar_lea.sflag [#allocation6], %s342
        %s344 = sand.u32 %s131, 1
        %s345 = smul.addr %s344, 16
        %s346 = scalar_lea.vmem [#allocation7], %s345
        // Predicated region
        $region37: #{tpu_custom_call.1} parent=31 // pred_check
          %p347 = pneg %p141
        $region38: #{tpu_custom_call.1} parent=31 // pred_check_branch
          %349 = sbr.rel (%p347) target = $region40
        $region39: #{tpu_custom_call.1} parent=31 // pred_region
          %s351 = ssub.s32 256, 256
          %352 = vsyncadd %s343, %s351
          %s353 = smul.addr %s29, 2
          %s354 = sadd.s32 %s30, %s353
          %s355 = smul.addr %s354, 128
          %s356 = scalar_lea.hbm %s4, %s355
          %s357 = sshll.u32 %s346, 4
          %s358 = int_to_ptr.vmem [resolvable:$true] %s357
          %363 = dma.vmem_to_hbm [thread:$0]  %s358, 256, %s356, %s343, 128, 128, 8
        $region40: #{tpu_custom_call.1} parent=31 // pred_fallthru
          _
      $region32: #{tpu_custom_call.1} parent=5 // pred_fallthru
        _
      %p364 = scmp.le.s32.totalorder 2, %s20
      // Predicated region
      $region41: #{tpu_custom_call.1} parent=5 // pred_check
        %p365 = pneg %p364
      $region42: #{tpu_custom_call.1} parent=5 // pred_check_branch
        %367 = sbr.rel (%p365) target = $region44
      $region43: #{tpu_custom_call.1} parent=5 // pred_region
        %s368 = ssub.s32 %s20, 2
        // Predicated region
        $region45: #{tpu_custom_call.1} parent=43 // pred_check
          %p369 = pneg %p147
        $region46: #{tpu_custom_call.1} parent=43 // pred_check_branch
          %371 = sbr.rel (%p369) target = $region48
        $region47: #{tpu_custom_call.1} parent=43 // pred_region
          %s372 = sand.u32 %s132, 1
          %s373 = scalar_lea.sflag [#allocation6], %s372
          %s374 = sand.u32 %s132, 1
          %s375 = smul.addr %s374, 16
          %s376 = scalar_lea.vmem [#allocation7], %s375
          %377 = dma.done %s373, 256
        $region48: #{tpu_custom_call.1} parent=43 // pred_fallthru
          _
      $region44: #{tpu_custom_call.1} parent=5 // pred_fallthru
        _
    $region6: #{tpu_custom_call.1} parent=1 // loop_footer
      %s24 = sadd.s32 1, %s20
    $region7: #{tpu_custom_call.1} parent=1 // loop_footer_branch
      %19 = sbr.rel target = $region3
    $region8: #{tpu_custom_call.1} parent=1 // loop_exit
      _
    %378 = vsyncpa [#allocation5], 1
    %s379 = scalar_lea.sflag [#allocation5], 1
    %380 = vsyncpa %s379, 1
    %381 = vsyncpa [#allocation6], 1
    %s382 = scalar_lea.sflag [#allocation6], 1
    %383 = vsyncpa %s382, 1

</llo_original>
